<compile_context>
chip_gen: v6e
topology: v6e:2x2x1
jax: 0.10.0
libtpu: 0.0.40
codegen_flags: <defaults>
</compile_context>

<pallas_src>
import functools

import jax
import jax.numpy as jnp
from jax.experimental import pallas as pl
from jax.experimental.pallas import tpu as pltpu


# ---------------------------------------------------------------------------
# Kernels
# ---------------------------------------------------------------------------

def _scse_fused_kernel(x_ref, wc_ref, we_ref, colb_ref, ws_ref, o_ref):
    """One batch element per grid step; full (C, HW) slab resident in VMEM."""
    x = x_ref[0]                      # (C, HW)
    wc = wc_ref[...]                  # (Cr, C)  compress 1x1 conv weight
    we = we_ref[...]                  # (C, Cr)  excitation 1x1 conv weight
    colb = colb_ref[...]              # (C, 2)   col 0: bc (zero-padded), col 1: be
    ws = ws_ref[...]                  # (1, C)   spatial 1x1 conv weight (no bias)
    cr = wc.shape[0]

    # ---- cSE: global average pool + two tiny FCs, kept in sublane orientation.
    xm = jnp.mean(x, axis=-1, keepdims=True)                         # (C, 1)
    z = jnp.dot(wc, xm, preferred_element_type=jnp.float32)          # (Cr, 1)
    z = jnp.maximum(z + colb[:cr, 0:1], 0.0)
    g = jnp.dot(we, z, preferred_element_type=jnp.float32)           # (C, 1)
    g = jax.nn.sigmoid(g + colb[:, 1:2])                             # channel gate

    # ---- sSE: (1, C) @ (C, HW) on the MXU + sigmoid -> per-pixel gate.
    s = jax.nn.sigmoid(jnp.dot(ws, x, preferred_element_type=jnp.float32))  # (1, HW)

    # x * g + x * s == x * (g + s)
    o_ref[0] = (x * (g + s)).astype(o_ref.dtype)


def _scse_gate_kernel(x_ref, wc_ref, we_ref, colb_ref, g_ref, acc_ref, *, inv_hw):
    """Gate pre-pass: per-batch channel gate, accumulated over HW tiles."""
    t = pl.program_id(1)

    @pl.when(t == 0)
    def _init():
        acc_ref[...] = jnp.zeros_like(acc_ref)

    acc_ref[...] += jnp.sum(x_ref[0], axis=-1, keepdims=True)        # (C, 1)

    @pl.when(t == pl.num_programs(1) - 1)
    def _finalize():
        wc = wc_ref[...]              # (Cr, C)
        we = we_ref[...]              # (C, Cr)
        colb = colb_ref[...]          # (C, 2)
        cr = wc.shape[0]
        xm = acc_ref[...] * inv_hw                                   # (C, 1)
        z = jnp.dot(wc, xm, preferred_element_type=jnp.float32)
        z = jnp.maximum(z + colb[:cr, 0:1], 0.0)                     # (Cr, 1)
        g = jnp.dot(we, z, preferred_element_type=jnp.float32)
        g_ref[0] = jax.nn.sigmoid(g + colb[:, 1:2]).astype(g_ref.dtype)


def _scse_apply_kernel(x_ref, g_ref, ws_ref, o_ref):
    """Apply pass on a (B, HW-tile) grid: out = x * (g + sigmoid(ws . x))."""
    x = x_ref[0]                      # (C, THW)
    g = g_ref[0]                      # (C, 1)
    ws = ws_ref[...]                  # (1, C)
    s = jax.nn.sigmoid(jnp.dot(ws, x, preferred_element_type=jnp.float32))  # (1, THW)
    o_ref[0] = (x * (g + s)).astype(o_ref.dtype)


# ---------------------------------------------------------------------------
# Wrapper
# ---------------------------------------------------------------------------

def _pick_hw_tile(hw, c, itemsize, tile_budget_bytes, max_thw):
    """Largest multiple of 128 that divides HW and fits the per-tile VMEM budget."""
    if hw % 128 != 0:
        return None
    cap = (tile_budget_bytes // (4 * c * itemsize)) // 128 * 128  # in+out, double-buffered
    cap = max(128, min(cap, max_thw, hw))
    best = None
    t = 128
    while t <= cap:
        if hw % t == 0:
            best = t
        t += 128
    return best


def scse_block(x_nchw, wc, bc, we, be, ws, *,
               fused_vmem_budget_bytes=48 * 1024 * 1024,
               tile_budget_bytes=16 * 1024 * 1024,
               max_thw=4096,
               force_tiled=False):
    """x_nchw: (B, C, H, W). Returns (B, C, H, W) = scSE(x)."""
    B, C, H, W = x_nchw.shape
    HW = H * W
    Cr = wc.shape[0]
    dtype = x_nchw.dtype
    itemsize = jnp.dtype(dtype).itemsize
    x = x_nchw.reshape(B, C, HW)

    # Pack the small vector params:
    #   colb (C, 2): col 0 = compress bias zero-padded from Cr to C, col 1 = excitation bias
    #   ws_row (1, C): spatial conv weight, row layout for the MXU dot.
    bc_pad = jnp.zeros((C,), dtype).at[:Cr].set(bc.astype(dtype))
    colb = jnp.stack([bc_pad, be.astype(dtype)], axis=1)              # (C, 2)
    ws_row = ws.astype(dtype).reshape(1, C)                           # (1, C)

    fused_bytes = 4 * C * HW * itemsize  # x in + out, double-buffered
    use_fused = (not force_tiled) and fused_bytes <= fused_vmem_budget_bytes

    thw = None
    if not use_fused:
        thw = _pick_hw_tile(HW, C, itemsize, tile_budget_bytes, max_thw)
        if thw is None:
            # TODO(synk): HW not a multiple of 128 -> no clean lane-aligned HW tiling;
            # fall back to the fused single-slab kernel.
            use_fused = True

    if use_fused:
        out = pl.pallas_call(
            _scse_fused_kernel,
            out_shape=jax.ShapeDtypeStruct((B, C, HW), dtype),
            grid_spec=pltpu.PrefetchScalarGridSpec(
                num_scalar_prefetch=0,
                grid=(B,),
                in_specs=[
                    pl.BlockSpec((1, C, HW), lambda b: (b, 0, 0)),   # x (one batch/step)
                    pl.BlockSpec((Cr, C), lambda b: (0, 0)),         # compress weight
                    pl.BlockSpec((C, Cr), lambda b: (0, 0)),         # excitation weight
                    pl.BlockSpec((C, 2), lambda b: (0, 0)),          # packed biases
                    pl.BlockSpec((1, C), lambda b: (0, 0)),          # spatial weight
                ],
                out_specs=pl.BlockSpec((1, C, HW), lambda b: (b, 0, 0)),
            ),
            compiler_params=pltpu.CompilerParams(
                dimension_semantics=("parallel",),
                vmem_limit_bytes=56 * 1024 * 1024),
        )(x, wc, we, colb, ws_row)
        return out.reshape(B, C, H, W)

    # ---- Tiled path: channel-gate pre-pass + HW-tiled apply ----
    n_t = HW // thw

    gate = pl.pallas_call(
        functools.partial(_scse_gate_kernel, inv_hw=1.0 / float(HW)),
        out_shape=jax.ShapeDtypeStruct((B, C, 1), jnp.float32),
        grid_spec=pltpu.PrefetchScalarGridSpec(
            num_scalar_prefetch=0,
            grid=(B, n_t),
            in_specs=[
                pl.BlockSpec((1, C, thw), lambda b, t: (b, 0, t)),   # x tile
                pl.BlockSpec((Cr, C), lambda b, t: (0, 0)),
                pl.BlockSpec((C, Cr), lambda b, t: (0, 0)),
                pl.BlockSpec((C, 2), lambda b, t: (0, 0)),
            ],
            out_specs=pl.BlockSpec((1, C, 1), lambda b, t: (b, 0, 0)),
            scratch_shapes=[pltpu.VMEM((C, 1), jnp.float32)],
        ),
        compiler_params=pltpu.CompilerParams(
            dimension_semantics=("parallel", "arbitrary"),
            vmem_limit_bytes=48 * 1024 * 1024),
    )(x, wc, we, colb)

    out = pl.pallas_call(
        _scse_apply_kernel,
        out_shape=jax.ShapeDtypeStruct((B, C, HW), dtype),
        grid_spec=pltpu.PrefetchScalarGridSpec(
            num_scalar_prefetch=0,
            grid=(B, n_t),
            in_specs=[
                pl.BlockSpec((1, C, thw), lambda b, t: (b, 0, t)),   # x tile
                pl.BlockSpec((1, C, 1), lambda b, t: (b, 0, 0)),     # channel gate
                pl.BlockSpec((1, C), lambda b, t: (0, 0)),           # spatial weight
            ],
            out_specs=pl.BlockSpec((1, C, thw), lambda b, t: (b, 0, t)),
        ),
        compiler_params=pltpu.CompilerParams(
            dimension_semantics=("parallel", "parallel"),
            vmem_limit_bytes=48 * 1024 * 1024),
    )(x, gate.astype(dtype), ws_row)
    return out.reshape(B, C, H, W)


# ---------------------------------------------------------------------------
# Pure-JAX reference (mirrors the PyTorch forward)
# ---------------------------------------------------------------------------

def scse_reference(x, wc, bc, we, be, ws):
    B, C, H, W = x.shape
    # cSE
    xm = jnp.mean(x, axis=(2, 3))                               # (B, C)
    z = jnp.maximum(jnp.einsum("rc,bc->br", wc, xm) + bc, 0.0)  # (B, Cr)
    g = jax.nn.sigmoid(jnp.einsum("cr,br->bc", we, z) + be)     # (B, C)
    x1 = x * g[:, :, None, None]
    # sSE
    s = jax.nn.sigmoid(jnp.einsum("c,bchw->bhw", ws, x))        # (B, H, W)
    x2 = x * s[:, None, :, :]
    return x1 + x2


if __name__ == "__main__":
    B, C, H, W = 2, 32, 16, 16
    ratio = 16
    Cr = C // ratio  # 2

    key = jax.random.PRNGKey(0)
    kx, kwc, kbc, kwe, kbe, kws = jax.random.split(key, 6)

    x = jax.random.normal(kx, (B, C, H, W), dtype=jnp.float32)

    # Kaiming-uniform-style init for 1x1 convs (fan_in = in_channels); small
    # nonzero biases so the bias paths are actually exercised.
    def kaiming_uniform(k, shape, fan_in):
        bound = jnp.sqrt(6.0 / fan_in)
        return jax.random.uniform(k, shape, jnp.float32, -bound, bound)

    wc = kaiming_uniform(kwc, (Cr, C), C)                  # compress:   C  -> Cr
    bc = 0.1 * jax.random.normal(kbc, (Cr,), jnp.float32)
    we = kaiming_uniform(kwe, (C, Cr), Cr)                 # excitation: Cr -> C
    be = 0.1 * jax.random.normal(kbe, (C,), jnp.float32)
    ws = kaiming_uniform(kws, (C,), C)                     # spatial:    C -> 1, no bias

    ref = scse_reference(x, wc, bc, we, be, ws)

    # Fused single-pass path (default when the (C, HW) slab fits the VMEM budget).
    out_fused = jax.block_until_ready(scse_block(x, wc, bc, we, be, ws))
    assert out_fused.shape == (B, C, H, W)
    assert jnp.allclose(out_fused, ref, atol=1e-5, rtol=1e-5), "fused path mismatch"

    # HW-tiled path (gate pre-pass + tiled apply), forced to exercise that branch too.
    out_tiled = jax.block_until_ready(
        scse_block(x, wc, bc, we, be, ws, force_tiled=True, max_thw=128))
    assert jnp.allclose(out_tiled, ref, atol=1e-5, rtol=1e-5), "tiled path mismatch"

    print("KERNEL_OK")
</pallas_src>

<mosaic_0001>
module attributes {stable_mosaic.version = 11 : i64} {
  func.func @_scse_fused_kernel(%arg0: i32, %arg1: memref<1x32x256xf32, #tpu.memory_space<vmem>>, %arg2: memref<2x32xf32, #tpu.memory_space<vmem>>, %arg3: memref<32x2xf32, #tpu.memory_space<vmem>>, %arg4: memref<32x2xf32, #tpu.memory_space<vmem>>, %arg5: memref<1x32xf32, #tpu.memory_space<vmem>>, %arg6: memref<1x32x256xf32, #tpu.memory_space<vmem>>) attributes {dimension_semantics = [#tpu.dimension_semantics<parallel>], iteration_bounds = array<i64: 2>, scalar_prefetch = 0 : i64, scratch_operands = 0 : i64, tpu.core_type = #tpu.core_type<tc>, window_params = [{transform_indices = @transform_0, window_bounds = array<i64: 1, 32, 256>}, {pipeline_mode = #tpu.pipeline_mode<synchronous>, transform_indices = @transform_1, window_bounds = array<i64: 2, 32>}, {pipeline_mode = #tpu.pipeline_mode<synchronous>, transform_indices = @transform_2, window_bounds = array<i64: 32, 2>}, {pipeline_mode = #tpu.pipeline_mode<synchronous>, transform_indices = @transform_3, window_bounds = array<i64: 32, 2>}, {pipeline_mode = #tpu.pipeline_mode<synchronous>, transform_indices = @transform_4, window_bounds = array<i64: 1, 32>}, {transform_indices = @transform_5, window_bounds = array<i64: 1, 32, 256>}]} {
    %c0 = arith.constant 0 : index
    %c0_0 = arith.constant 0 : index
    %c0_1 = arith.constant 0 : index
    %0 = vector.load %arg1[%c0, %c0_0, %c0_1] : memref<1x32x256xf32, #tpu.memory_space<vmem>>, vector<1x32x256xf32>
    %1 = vector.shape_cast %0 : vector<1x32x256xf32> to vector<32x256xf32>
    %c0_2 = arith.constant 0 : index
    %c0_3 = arith.constant 0 : index
    %2 = vector.load %arg2[%c0_2, %c0_3] : memref<2x32xf32, #tpu.memory_space<vmem>>, vector<2x32xf32>
    %c0_4 = arith.constant 0 : index
    %c0_5 = arith.constant 0 : index
    %3 = vector.load %arg3[%c0_4, %c0_5] : memref<32x2xf32, #tpu.memory_space<vmem>>, vector<32x2xf32>
    %c0_6 = arith.constant 0 : index
    %c0_7 = arith.constant 0 : index
    %4 = vector.load %arg4[%c0_6, %c0_7] : memref<32x2xf32, #tpu.memory_space<vmem>>, vector<32x2xf32>
    %c0_8 = arith.constant 0 : index
    %c0_9 = arith.constant 0 : index
    %5 = vector.load %arg5[%c0_8, %c0_9] : memref<1x32xf32, #tpu.memory_space<vmem>>, vector<1x32xf32>
    %cst = arith.constant dense<0.000000e+00> : vector<32xf32>
    %6 = vector.multi_reduction <add>, %1, %cst [1] : vector<32x256xf32> to vector<32xf32>
    %7 = vector.shape_cast %6 : vector<32xf32> to vector<32x1xf32>
    %cst_10 = arith.constant 2.560000e+02 : f32
    %8 = vector.broadcast %cst_10 : f32 to vector<32x1xf32>
    %9 = arith.divf %7, %8 : vector<32x1xf32>
    %cst_11 = arith.constant dense<0.000000e+00> : vector<2x1xf32>
    %10 = tpu.matmul %2, %9, %cst_11 {dimension_numbers = #tpu.dot_dimension_numbers<[1], [0], [0], [1], [0, 0, 1, 1], [], []>} : vector<2x32xf32>, vector<32x1xf32>, vector<2x1xf32> -> vector<2x1xf32>
    %11 = vector.extract_strided_slice %4 {offsets = [0, 0], sizes = [2, 1], strides = [1, 1]} : vector<32x2xf32> to vector<2x1xf32>
    %12 = arith.addf %10, %11 : vector<2x1xf32>
    %cst_12 = arith.constant 0.000000e+00 : f32
    %13 = vector.broadcast %cst_12 : f32 to vector<2x1xf32>
    %14 = arith.maximumf %12, %13 : vector<2x1xf32>
    %cst_13 = arith.constant dense<0.000000e+00> : vector<32x1xf32>
    %15 = tpu.matmul %3, %14, %cst_13 {dimension_numbers = #tpu.dot_dimension_numbers<[1], [0], [0], [1], [0, 0, 1, 1], [], []>} : vector<32x2xf32>, vector<2x1xf32>, vector<32x1xf32> -> vector<32x1xf32>
    %16 = vector.extract_strided_slice %4 {offsets = [0, 1], sizes = [32, 1], strides = [1, 1]} : vector<32x2xf32> to vector<32x1xf32>
    %17 = arith.addf %15, %16 : vector<32x1xf32>
    %18 = arith.negf %17 : vector<32x1xf32>
    %19 = math.exp %18 : vector<32x1xf32>
    %cst_14 = arith.constant 1.000000e+00 : f32
    %20 = vector.broadcast %cst_14 : f32 to vector<32x1xf32>
    %21 = arith.addf %20, %19 : vector<32x1xf32>
    %22 = arith.divf %20, %21 : vector<32x1xf32>
    %cst_15 = arith.constant dense<0.000000e+00> : vector<1x256xf32>
    %23 = tpu.matmul %5, %1, %cst_15 {dimension_numbers = #tpu.dot_dimension_numbers<[1], [0], [0], [1], [0, 0, 1, 1], [], []>} : vector<1x32xf32>, vector<32x256xf32>, vector<1x256xf32> -> vector<1x256xf32>
    %24 = arith.negf %23 : vector<1x256xf32>
    %25 = math.exp %24 : vector<1x256xf32>
    %cst_16 = arith.constant 1.000000e+00 : f32
    %26 = vector.broadcast %cst_16 : f32 to vector<1x256xf32>
    %27 = arith.addf %26, %25 : vector<1x256xf32>
    %28 = arith.divf %26, %27 : vector<1x256xf32>
    %29 = vector.broadcast %22 : vector<32x1xf32> to vector<32x256xf32>
    %30 = vector.broadcast %28 : vector<1x256xf32> to vector<32x256xf32>
    %31 = arith.addf %29, %30 : vector<32x256xf32>
    %32 = arith.mulf %1, %31 : vector<32x256xf32>
    %c0_17 = arith.constant 0 : index
    %c0_18 = arith.constant 0 : index
    %c0_19 = arith.constant 0 : index
    %33 = vector.load %arg6[%c0_17, %c0_18, %c0_19] : memref<1x32x256xf32, #tpu.memory_space<vmem>>, vector<1x32x256xf32>
    %34 = vector.shape_cast %33 : vector<1x32x256xf32> to vector<32x256xf32>
    %35 = vector.shape_cast %32 : vector<32x256xf32> to vector<1x32x256xf32>
    tpu.vector_store %arg6[%c0_17, %c0_18, %c0_19], %35 {strides = array<i32>} : memref<1x32x256xf32, #tpu.memory_space<vmem>>, vector<1x32x256xf32>,
    return
  }
  func.func @transform_0(%arg0: i32) -> (i32, i32, i32) {
    %c0_i32 = arith.constant 0 : i32
    %c0_i32_0 = arith.constant 0 : i32
    %c0_i32_1 = arith.constant 0 : i32
    return %arg0, %c0_i32, %c0_i32_0 : i32, i32, i32
  }
  func.func @transform_1(%arg0: i32) -> (i32, i32) {
    %c0_i32 = arith.constant 0 : i32
    %c0_i32_0 = arith.constant 0 : i32
    %c0_i32_1 = arith.constant 0 : i32
    return %c0_i32, %c0_i32_0 : i32, i32
  }
  func.func @transform_2(%arg0: i32) -> (i32, i32) {
    %c0_i32 = arith.constant 0 : i32
    %c0_i32_0 = arith.constant 0 : i32
    %c0_i32_1 = arith.constant 0 : i32
    return %c0_i32, %c0_i32_0 : i32, i32
  }
  func.func @transform_3(%arg0: i32) -> (i32, i32) {
    %c0_i32 = arith.constant 0 : i32
    %c0_i32_0 = arith.constant 0 : i32
    %c0_i32_1 = arith.constant 0 : i32
    return %c0_i32, %c0_i32_0 : i32, i32
  }
  func.func @transform_4(%arg0: i32) -> (i32, i32) {
    %c0_i32 = arith.constant 0 : i32
    %c0_i32_0 = arith.constant 0 : i32
    %c0_i32_1 = arith.constant 0 : i32
    return %c0_i32, %c0_i32_0 : i32, i32
  }
  func.func @transform_5(%arg0: i32) -> (i32, i32, i32) {
    %c0_i32 = arith.constant 0 : i32
    %c0_i32_0 = arith.constant 0 : i32
    %c0_i32_1 = arith.constant 0 : i32
    return %arg0, %c0_i32, %c0_i32_0 : i32, i32, i32
  }
}

</mosaic_0001>

<llo_original>
// kernel: tpu_custom_call.1
$region0: #{tpu_custom_call.1}
  #allocation0 [shape = 'u32[]', space=smem, size = 0x4, offset = 0x4, fixed_abs, tag = 'smem constant byte address 0x4 - core index']
  #allocation1 [shape = 'u32[144,128]{1,0:T(1,128)}', space=vmem, size = 0x12000, scoped, tag = 'internal scratch']
  %s0 = inlined_call_operand.hbm [shape: f32[2,32,256], index: 0, kind: input, shape index: {}]
  %s1 = inlined_call_operand.vmem [shape: f32[2,32], index: 1, kind: input, shape index: {}]
  %s2 = inlined_call_operand.vmem [shape: f32[32,2], index: 2, kind: input, shape index: {}]
  %s3 = inlined_call_operand.vmem [shape: f32[32,2], index: 3, kind: input, shape index: {}]
  %s4 = inlined_call_operand.vmem [shape: f32[1,32], index: 4, kind: input, shape index: {}]
  %s5 = inlined_call_operand.hbm [shape: f32[2,32,256], index: 5, kind: output, shape index: {}]
  %s6 = sld [smem:[#allocation0]]
  $region57: #{tpu_custom_call.1} parent=0
    _
  %s8 = ssub.s32 1, %s6
  %s9 = scalar_select 0, %s8, %s6
  $region1: #{tpu_custom_call.1} parent=0
    #allocation2 [shape = 'u8[65536]{0}', space=vmem, size = 0x10000, scoped, tag = 'input window, operand 0']
    #allocation3 [shape = 's32[2]{0}', space=sflag, size = 0x8, scoped, tag = 'scoped memory for tpu_custom_call.1']
    #allocation4 [shape = 's32[2]{0}', space=sflag, size = 0x8, scoped, tag = 'scoped memory for tpu_custom_call.1']
    #allocation5 [shape = 'u8[65536]{0}', space=vmem, size = 0x10000, scoped, tag = 'output window, operand 0']
    %10 = vsyncpa [#allocation3], 0
    %s11 = scalar_lea.sflag [#allocation3], 1
    %12 = vsyncpa %s11, 0
    %13 = vsyncpa [#allocation4], 0
    %s14 = scalar_lea.sflag [#allocation4], 1
    %15 = vsyncpa %s14, 0
    loop: start=0, step=1, limit=4
    $region2: #{tpu_custom_call.1} parent=1 // loop_pre_header
      _
    $region3: #{tpu_custom_call.1} parent=1 // loop_header
      %s17 = sphi 0, %s21
      %p18 = scmp.ge.s32.totalorder %s17, 4
      %s27 = sphi 0, %s29
      %s30 = sphi 0, %s27
      %s31 = sphi 0, %s30
      %s47 = sphi 0, %s31
      %s51 = sphi 0, %s51
      %s53 = sphi 0, %s51
      %s54 = sphi 0, %s53
      %s68 = sphi 0, %s54
      %s72 = sphi 0, %s72
      %s74 = sphi 0, %s72
      %s75 = sphi 0, %s74
      %s89 = sphi 0, %s75
      %s93 = sphi 0, %s93
      %s95 = sphi 0, %s93
      %s96 = sphi 0, %s95
      %s110 = sphi 0, %s96
      %s114 = sphi 0, %s114
      %s116 = sphi 0, %s114
      %s117 = sphi 0, %s116
      %s131 = sphi 0, %s117
      %s137 = sphi 0, %s139
      %s140 = sphi 0, %s137
      %s141 = sphi 0, %s140
      %s157 = sphi 0, %s141
    $region4: #{tpu_custom_call.1} parent=1 // loop_header_branch
      %20 = sbr.rel (%p18) target = $region8
    $region5: #{tpu_custom_call.1} parent=1 // loop_body
      %s22 = ssub.s32 %s17, 1
      %s23 = ssub.s32 %s17, 2
      %s24 = sadd.s32 %s17, 1
      %s25 = ssub.s32 %s17, %s24
      %p26 = scmp.eq.s32.totalorder %s25, 0
      %s28 = sadd.s32 %s27, 1
      %s29 = scalar_select %p26, %s27, %s28
      %p32 = pneg %p26
      %p33 = scmp.eq.s32.totalorder %s17, 1
      %p34 = por %p32, %p33
      %p35 = scmp.ne.s32.totalorder %s27, %s30
      %p36 = scmp.eq.s32.totalorder %s17, 0
      %p37 = por %p35, %p36
      %p38 = scmp.ne.s32.totalorder %s27, %s30
      %p39 = scmp.eq.s32.totalorder %s22, 1
      %p40 = por %p38, %p39
      %p41 = scmp.ne.s32.totalorder %s30, %s31
      %p42 = scmp.eq.s32.totalorder %s22, 0
      %p43 = por %p41, %p42
      %p44 = scmp.ne.s32.totalorder %s30, %s31
      %p45 = scmp.eq.s32.totalorder %s23, 1
      %p46 = por %p44, %p45
      %p48 = scmp.ne.s32.totalorder %s31, %s47
      %p49 = scmp.eq.s32.totalorder %s23, 0
      %p50 = por %p48, %p49
      %s52 = sadd.s32 %s51, 1
      %p55 = scmp.eq.s32.totalorder %s17, 1
      %p56 = scmp.ne.s32.totalorder %s51, %s53
      %p57 = scmp.eq.s32.totalorder %s17, 0
      %p58 = por %p56, %p57
      %p59 = scmp.ne.s32.totalorder %s51, %s53
      %p60 = scmp.eq.s32.totalorder %s22, 1
      %p61 = por %p59, %p60
      %p62 = scmp.ne.s32.totalorder %s53, %s54
      %p63 = scmp.eq.s32.totalorder %s22, 0
      %p64 = por %p62, %p63
      %p65 = scmp.ne.s32.totalorder %s53, %s54
      %p66 = scmp.eq.s32.totalorder %s23, 1
      %p67 = por %p65, %p66
      %p69 = scmp.ne.s32.totalorder %s54, %s68
      %p70 = scmp.eq.s32.totalorder %s23, 0
      %p71 = por %p69, %p70
      %s73 = sadd.s32 %s72, 1
      %p76 = scmp.eq.s32.totalorder %s17, 1
      %p77 = scmp.ne.s32.totalorder %s72, %s74
      %p78 = scmp.eq.s32.totalorder %s17, 0
      %p79 = por %p77, %p78
      %p80 = scmp.ne.s32.totalorder %s72, %s74
      %p81 = scmp.eq.s32.totalorder %s22, 1
      %p82 = por %p80, %p81
      %p83 = scmp.ne.s32.totalorder %s74, %s75
      %p84 = scmp.eq.s32.totalorder %s22, 0
      %p85 = por %p83, %p84
      %p86 = scmp.ne.s32.totalorder %s74, %s75
      %p87 = scmp.eq.s32.totalorder %s23, 1
      %p88 = por %p86, %p87
      %p90 = scmp.ne.s32.totalorder %s75, %s89
      %p91 = scmp.eq.s32.totalorder %s23, 0
      %p92 = por %p90, %p91
      %s94 = sadd.s32 %s93, 1
      %p97 = scmp.eq.s32.totalorder %s17, 1
      %p98 = scmp.ne.s32.totalorder %s93, %s95
      %p99 = scmp.eq.s32.totalorder %s17, 0
      %p100 = por %p98, %p99
      %p101 = scmp.ne.s32.totalorder %s93, %s95
      %p102 = scmp.eq.s32.totalorder %s22, 1
      %p103 = por %p101, %p102
      %p104 = scmp.ne.s32.totalorder %s95, %s96
      %p105 = scmp.eq.s32.totalorder %s22, 0
      %p106 = por %p104, %p105
      %p107 = scmp.ne.s32.totalorder %s95, %s96
      %p108 = scmp.eq.s32.totalorder %s23, 1
      %p109 = por %p107, %p108
      %p111 = scmp.ne.s32.totalorder %s96, %s110
      %p112 = scmp.eq.s32.totalorder %s23, 0
      %p113 = por %p111, %p112
      %s115 = sadd.s32 %s114, 1
      %p118 = scmp.eq.s32.totalorder %s17, 1
      %p119 = scmp.ne.s32.totalorder %s114, %s116
      %p120 = scmp.eq.s32.totalorder %s17, 0
      %p121 = por %p119, %p120
      %p122 = scmp.ne.s32.totalorder %s114, %s116
      %p123 = scmp.eq.s32.totalorder %s22, 1
      %p124 = por %p122, %p123
      %p125 = scmp.ne.s32.totalorder %s116, %s117
      %p126 = scmp.eq.s32.totalorder %s22, 0
      %p127 = por %p125, %p126
      %p128 = scmp.ne.s32.totalorder %s116, %s117
      %p129 = scmp.eq.s32.totalorder %s23, 1
      %p130 = por %p128, %p129
      %p132 = scmp.ne.s32.totalorder %s117, %s131
      %p133 = scmp.eq.s32.totalorder %s23, 0
      %p134 = por %p132, %p133
      %s135 = ssub.s32 %s17, %s24
      %p136 = scmp.eq.s32.totalorder %s135, 0
      %s138 = sadd.s32 %s137, 1
      %s139 = scalar_select %p136, %s137, %s138
      %p142 = pneg %p136
      %p143 = scmp.eq.s32.totalorder %s17, 1
      %p144 = por %p142, %p143
      %p145 = scmp.ne.s32.totalorder %s137, %s140
      %p146 = scmp.eq.s32.totalorder %s17, 0
      %p147 = por %p145, %p146
      %p148 = scmp.ne.s32.totalorder %s137, %s140
      %p149 = scmp.eq.s32.totalorder %s22, 1
      %p150 = por %p148, %p149
      %p151 = scmp.ne.s32.totalorder %s140, %s141
      %p152 = scmp.eq.s32.totalorder %s22, 0
      %p153 = por %p151, %p152
      %p154 = scmp.ne.s32.totalorder %s140, %s141
      %p155 = scmp.eq.s32.totalorder %s23, 1
      %p156 = por %p154, %p155
      %p158 = scmp.ne.s32.totalorder %s141, %s157
      %p159 = scmp.eq.s32.totalorder %s23, 0
      %p160 = por %p158, %p159
      %p161 = scmp.le.s32.totalorder 1, %s17
      %p162 = scmp.lt.s32.totalorder %s17, 3
      %p163 = pnand %p161, %p162
      %p164 = pneg %p163
      // Predicated region
      $region9: #{tpu_custom_call.1} parent=5 // pred_check
        _
      $region10: #{tpu_custom_call.1} parent=5 // pred_check_branch
        %166 = sbr.rel (%p163) target = $region12
      $region11: #{tpu_custom_call.1} parent=5 // pred_region
        %s167 = ssub.s32 %s17, 1
        // Predicated region
        $region13: #{tpu_custom_call.1} parent=11 // pred_check
          %p168 = pneg %p64
        $region14: #{tpu_custom_call.1} parent=11 // pred_check_branch
          %170 = sbr.rel (%p168) target = $region16
        $region15: #{tpu_custom_call.1} parent=11 // pred_region
          _
        $region16: #{tpu_custom_call.1} parent=11 // pred_fallthru
          _
        // Predicated region
        $region17: #{tpu_custom_call.1} parent=11 // pred_check
          %p171 = pneg %p85
        $region18: #{tpu_custom_call.1} parent=11 // pred_check_branch
          %173 = sbr.rel (%p171) target = $region20
        $region19: #{tpu_custom_call.1} parent=11 // pred_region
          _
        $region20: #{tpu_custom_call.1} parent=11 // pred_fallthru
          _
        // Predicated region
        $region21: #{tpu_custom_call.1} parent=11 // pred_check
          %p174 = pneg %p106
        $region22: #{tpu_custom_call.1} parent=11 // pred_check_branch
          %176 = sbr.rel (%p174) target = $region24
        $region23: #{tpu_custom_call.1} parent=11 // pred_region
          _
        $region24: #{tpu_custom_call.1} parent=11 // pred_fallthru
          _
        // Predicated region
        $region25: #{tpu_custom_call.1} parent=11 // pred_check
          %p177 = pneg %p127
        $region26: #{tpu_custom_call.1} parent=11 // pred_check_branch
          %179 = sbr.rel (%p177) target = $region28
        $region27: #{tpu_custom_call.1} parent=11 // pred_region
          _
        $region28: #{tpu_custom_call.1} parent=11 // pred_fallthru
          _
      $region12: #{tpu_custom_call.1} parent=5 // pred_fallthru
        _
      %p180 = scmp.lt.s32.totalorder %s17, 2
      // Predicated region
      $region29: #{tpu_custom_call.1} parent=5 // pred_check
        %p181 = pneg %p180
      $region30: #{tpu_custom_call.1} parent=5 // pred_check_branch
        %183 = sbr.rel (%p181) target = $region32
      $region31: #{tpu_custom_call.1} parent=5 // pred_region
        // Predicated region
        $region33: #{tpu_custom_call.1} parent=31 // pred_check
          %p184 = pneg %p37
        $region34: #{tpu_custom_call.1} parent=31 // pred_check_branch
          %186 = sbr.rel (%p184) target = $region36
        $region35: #{tpu_custom_call.1} parent=31 // pred_region
          %s187 = sand.u32 %s27, 1
          %s188 = scalar_lea.sflag [#allocation3], %s187
          %s189 = sand.u32 %s27, 1
          %s190 = smul.addr %s189, 64
          %s191 = scalar_lea.vmem [#allocation2], %s190
          %s193 = ssub.s32 1024, 1024
          %194 = vsyncadd %s188, %s193
          %s195 = smul.addr %s17, 8
          %s196 = smul.addr %s195, 128
          %s197 = scalar_lea.hbm %s0, %s196
          %s198 = sshll.u32 %s191, 4
          %s199 = int_to_ptr.vmem [resolvable:$true] %s198
          %204 = dma.hbm_to_vmem [thread:$0]  %s197, 1024, %s199, %s188, 256, 256, 16
        $region36: #{tpu_custom_call.1} parent=31 // pred_fallthru
          _
      $region32: #{tpu_custom_call.1} parent=5 // pred_fallthru
        _
      %p205 = scmp.le.s32.totalorder 1, %s17
      %p206 = scmp.lt.s32.totalorder %s17, 3
      %p207 = pnand %p205, %p206
      %p208 = pneg %p207
      // Predicated region
      $region37: #{tpu_custom_call.1} parent=5 // pred_check
        _
      $region38: #{tpu_custom_call.1} parent=5 // pred_check_branch
        %210 = sbr.rel (%p207) target = $region40
      $region39: #{tpu_custom_call.1} parent=5 // pred_region
        %s211 = ssub.s32 %s17, 1
        %s212 = sand.u32 %s30, 1
        %s213 = scalar_lea.sflag [#allocation3], %s212
        %s214 = sand.u32 %s30, 1
        %s215 = smul.addr %s214, 64
        %s216 = scalar_lea.vmem [#allocation2], %s215
        // Predicated region
        $region41: #{tpu_custom_call.1} parent=39 // pred_check
          %p217 = pneg %p43
        $region42: #{tpu_custom_call.1} parent=39 // pred_check_branch
          %219 = sbr.rel (%p217) target = $region44
        $region43: #{tpu_custom_call.1} parent=39 // pred_region
          %220 = dma.done %s213, 1024
        $region44: #{tpu_custom_call.1} parent=39 // pred_fallthru
          _
        %s221 = sand.u32 %s30, 1
        %s222 = scalar_lea.sflag [#allocation3], %s221
        %s223 = sand.u32 %s30, 1
        %s224 = smul.addr %s223, 64
        %s225 = scalar_lea.vmem [#allocation2], %s224
        %p226 = pneg %p43
        %p227 = pneg %p40
        %p228 = pneg %p64
        %p229 = pneg %p61
        %p230 = pneg %p85
        %p231 = pneg %p82
        %p232 = pneg %p106
        %p233 = pneg %p103
        %p234 = pneg %p127
        %p235 = pneg %p124
        %p236 = pneg %p153
        %p237 = pneg %p150
        %s238 = sand.u32 %s140, 1
        %s239 = scalar_lea.sflag [#allocation4], %s238
        %s240 = sand.u32 %s140, 1
        %s241 = smul.addr %s240, 64
        %s242 = scalar_lea.vmem [#allocation5], %s241
        %v243 = vld [vmem:[%s216] sm:$0xff]
        %v244 = vld [vmem:[%s216 + $0x8] sm:$0xff]
        %v245 = vld [vmem:[%s216 + $0x10] sm:$0xff]
        %v246 = vld [vmem:[%s216 + $0x18] sm:$0xff]
        %v247 = vld [vmem:[%s216 + $0x20] sm:$0xff]
        %v248 = vld [vmem:[%s216 + $0x28] sm:$0xff]
        %v249 = vld [vmem:[%s216 + $0x30] sm:$0xff]
        %v250 = vld [vmem:[%s216 + $0x38] sm:$0xff]
        %v251 = vld [vmem:[%s1] sm:$0x3]
        %v252 = vld [vmem:[%s2] sm:$0xff]
        %v253 = vld [vmem:[%s2 + $0x8] sm:$0xff]
        %v254 = vld [vmem:[%s2 + $0x10] sm:$0xff]
        %v255 = vld [vmem:[%s2 + $0x18] sm:$0xff]
        %v256 = vld [vmem:[%s3] sm:$0xff]
        %v257 = vld [vmem:[%s3 + $0x8] sm:$0xff]
        %v258 = vld [vmem:[%s3 + $0x10] sm:$0xff]
        %v259 = vld [vmem:[%s3 + $0x18] sm:$0xff]
        %v260 = vld [vmem:[%s4] sm:$0x1]
        %v261 = vadd.f32 %v243, %v244
        %262 = vadd.xlane.f32.xlu0 %v261
        %v263 = vpop.xlane.xlu0 %262
        %v264 = vadd.f32 %v245, %v246
        %265 = vadd.xlane.f32.xlu0 %v264
        %v266 = vpop.xlane.xlu0 %265
        %v267 = vadd.f32 %v247, %v248
        %268 = vadd.xlane.f32.xlu0 %v267
        %v269 = vpop.xlane.xlu0 %268
        %v270 = vadd.f32 %v249, %v250
        %271 = vadd.xlane.f32.xlu0 %v270
        %v272 = vpop.xlane.xlu0 %271
        %v273 = vrcp.pop 256.0
        %v274 = vmul.f32 %v263, %v273
        %v275 = vmul.f32 %v266, %v273
        %v276 = vmul.f32 %v269, %v273
        %v277 = vmul.f32 %v272, %v273
        %vm278 = vcmask 261120
        %v280 = vsel %vm278, %v251, 0
        %282 = vmatprep.subr.mxu0 0.0
        %283 = vmatpush1.msra.mxu0 0.0
        %284 = vmatprep.subr.mxu0 0.0
        %285 = vmatpush1.msra.mxu0 0.0
        %286 = vmatprep.subr.mxu0 0.0
        %287 = vmatpush1.msra.mxu0 0.0
        %288 = vmatprep.subr.mxu0 0.0
        %289 = vmatpush1.msra.mxu0 0.0
        %290 = vmatprep.subr.mxu0 0.0
        %291 = vmatpush1.msra.mxu0 0.0
        %292 = vmatprep.subr.mxu0 0.0
        %293 = vmatpush1.msra.mxu0 0.0
        %294 = vmatprep.subr.mxu0 0.0
        %295 = vmatpush1.msra.mxu0 0.0
        %296 = vmatprep.subr.mxu0 0.0
        %297 = vmatpush1.msra.mxu0 0.0
        %298 = vmatprep.subr.mxu0 0.0
        %299 = vmatpush1.msra.mxu0 0.0
        %300 = vmatprep.subr.mxu0 0.0
        %301 = vmatpush1.msra.mxu0 0.0
        %302 = vmatprep.subr.mxu0 0.0
        %303 = vmatpush1.msra.mxu0 0.0
        %304 = vmatprep.subr.mxu0 0.0
        %305 = vmatpush1.msra.mxu0 0.0
        %306 = vmatprep.subr.mxu0 0.0
        %307 = vmatpush1.msra.mxu0 %v277
        %308 = vmatprep.subr.mxu0 0.0
        %309 = vmatpush1.msra.mxu0 %v276
        %310 = vmatprep.subr.mxu0 0.0
        %311 = vmatpush1.msra.mxu0 %v275
        %312 = vmatprep.subr.mxu0 0.0
        %313 = vmatpush1.msra.mxu0 %v274
        %314 = vmatprep.subr.mxu0 0.0
        %315 = vmatpush2.msra.mxu0 0.0
        %316 = vmatprep.subr.mxu0 0.0
        %317 = vmatpush2.msra.mxu0 0.0
        %318 = vmatprep.subr.mxu0 0.0
        %319 = vmatpush2.msra.mxu0 0.0
        %320 = vmatprep.subr.mxu0 0.0
        %321 = vmatpush2.msra.mxu0 0.0
        %322 = vmatprep.subr.mxu0 0.0
        %323 = vmatpush2.msra.mxu0 0.0
        %324 = vmatprep.subr.mxu0 0.0
        %325 = vmatpush2.msra.mxu0 0.0
        %326 = vmatprep.subr.mxu0 0.0
        %327 = vmatpush2.msra.mxu0 0.0
        %328 = vmatprep.subr.mxu0 0.0
        %329 = vmatpush2.msra.mxu0 0.0
        %330 = vmatprep.subr.mxu0 0.0
        %331 = vmatpush2.msra.mxu0 0.0
        %332 = vmatprep.subr.mxu0 0.0
        %333 = vmatpush2.msra.mxu0 0.0
        %334 = vmatprep.subr.mxu0 0.0
        %335 = vmatpush2.msra.mxu0 0.0
        %336 = vmatprep.subr.mxu0 0.0
        %337 = vmatpush2.msra.mxu0 0.0
        %338 = vmatprep.subr.mxu0 0.0
        %339 = vmatpush2.msra.mxu0 0.0
        %340 = vmatprep.subr.mxu0 0.0
        %341 = vmatpush2.msra.mxu0 0.0
        %342 = vmatprep.subr.mxu0 0.0
        %343 = vmatpush2.msra.mxu0 0.0
        %344 = vmatprep.subr.mxu0 0.0
        %345 = vmatpush2.msra.mxu0 0.0
        %346 = vmatprep.mubr.f32.mxu0 0.0
        %347 = vmatmul.mubr.f32.gmra.mxu0 %v280
        %v348 = vpop.f32.mrf.mxu0
        %v349 = vadd.f32 %v256, %v348
        %v350 = vpop.f32.mrf.mxu0
        %351 = vdwg.mxu0
        %v352 = vmax.f32 %v349, 0.0
        %357 = vrot.lane.b32.xlu0 %v256, 127
        %v358 = vpop.permute.xlu0 %357
        %359 = vrot.lane.b32.xlu0 %v257, 127
        %v360 = vpop.permute.xlu0 %359
        %361 = vrot.lane.b32.xlu0 %v258, 127
        %v362 = vpop.permute.xlu0 %361
        %363 = vrot.lane.b32.xlu0 %v259, 127
        %v364 = vpop.permute.xlu0 %363
        %vm369 = vcmask 15360
        %v371 = vsel %vm369, %v252, 0
        %v374 = vsel %vm369, %v253, 0
        %v377 = vsel %vm369, %v254, 0
        %v380 = vsel %vm369, %v255, 0
        %vm382 = vcmask 1041408
        %v384 = vsel %vm382, %v352, 0
        %386 = vmatprep.subr.mxu0 0.0
        %387 = vmatpush1.msra.mxu0 0.0
        %388 = vmatprep.subr.mxu0 0.0
        %389 = vmatpush1.msra.mxu0 0.0
        %390 = vmatprep.subr.mxu0 0.0
        %391 = vmatpush1.msra.mxu0 0.0
        %392 = vmatprep.subr.mxu0 0.0
        %393 = vmatpush1.msra.mxu0 0.0
        %394 = vmatprep.subr.mxu0 0.0
        %395 = vmatpush1.msra.mxu0 0.0
        %396 = vmatprep.subr.mxu0 0.0
        %397 = vmatpush1.msra.mxu0 0.0
        %398 = vmatprep.subr.mxu0 0.0
        %399 = vmatpush1.msra.mxu0 0.0
        %400 = vmatprep.subr.mxu0 0.0
        %401 = vmatpush1.msra.mxu0 0.0
        %402 = vmatprep.subr.mxu0 0.0
        %403 = vmatpush1.msra.mxu0 0.0
        %404 = vmatprep.subr.mxu0 0.0
        %405 = vmatpush1.msra.mxu0 0.0
        %406 = vmatprep.subr.mxu0 0.0
        %407 = vmatpush1.msra.mxu0 0.0
        %408 = vmatprep.subr.mxu0 0.0
        %409 = vmatpush1.msra.mxu0 0.0
        %410 = vmatprep.subr.mxu0 0.0
        %411 = vmatpush1.msra.mxu0 0.0
        %412 = vmatprep.subr.mxu0 0.0
        %413 = vmatpush1.msra.mxu0 0.0
        %414 = vmatprep.subr.mxu0 0.0
        %415 = vmatpush1.msra.mxu0 0.0
        %416 = vmatprep.subr.mxu0 0.0
        %417 = vmatpush1.msra.mxu0 %v384
        %418 = vmatprep.subr.mxu0 0.0
        %419 = vmatpush2.msra.mxu0 0.0
        %420 = vmatprep.subr.mxu0 0.0
        %421 = vmatpush2.msra.mxu0 0.0
        %422 = vmatprep.subr.mxu0 0.0
        %423 = vmatpush2.msra.mxu0 0.0
        %424 = vmatprep.subr.mxu0 0.0
        %425 = vmatpush2.msra.mxu0 0.0
        %426 = vmatprep.subr.mxu0 0.0
        %427 = vmatpush2.msra.mxu0 0.0
        %428 = vmatprep.subr.mxu0 0.0
        %429 = vmatpush2.msra.mxu0 0.0
        %430 = vmatprep.subr.mxu0 0.0
        %431 = vmatpush2.msra.mxu0 0.0
        %432 = vmatprep.subr.mxu0 0.0
        %433 = vmatpush2.msra.mxu0 0.0
        %434 = vmatprep.subr.mxu0 0.0
        %435 = vmatpush2.msra.mxu0 0.0
        %436 = vmatprep.subr.mxu0 0.0
        %437 = vmatpush2.msra.mxu0 0.0
        %438 = vmatprep.subr.mxu0 0.0
        %439 = vmatpush2.msra.mxu0 0.0
        %440 = vmatprep.subr.mxu0 0.0
        %441 = vmatpush2.msra.mxu0 0.0
        %442 = vmatprep.subr.mxu0 0.0
        %443 = vmatpush2.msra.mxu0 0.0
        %444 = vmatprep.subr.mxu0 0.0
        %445 = vmatpush2.msra.mxu0 0.0
        %446 = vmatprep.subr.mxu0 0.0
        %447 = vmatpush2.msra.mxu0 0.0
        %448 = vmatprep.subr.mxu0 0.0
        %449 = vmatpush2.msra.mxu0 0.0
        %450 = vmatprep.mubr.f32.mxu0 0.0
        %451 = vmatmul.mubr.f32.gmra.mxu0 %v371
        %v452 = vpop.f32.mrf.mxu0
        %v453 = vadd.f32 %v358, %v452
        %v454 = vpop.f32.mrf.mxu0
        %455 = vmatprep.mubr.f32.mxu0 0.0
        %456 = vmatmul.mubr.f32.gmra.mxu0 %v374
        %v457 = vpop.f32.mrf.mxu0
        %v458 = vadd.f32 %v360, %v457
        %v459 = vpop.f32.mrf.mxu0
        %460 = vmatprep.mubr.f32.mxu0 0.0
        %461 = vmatmul.mubr.f32.gmra.mxu0 %v377
        %v462 = vpop.f32.mrf.mxu0
        %v463 = vadd.f32 %v362, %v462
        %v464 = vpop.f32.mrf.mxu0
        %465 = vmatprep.mubr.f32.mxu0 0.0
        %466 = vmatmul.mubr.f32.gmra.mxu0 %v380
        %v467 = vpop.f32.mrf.mxu0
        %v468 = vadd.f32 %v364, %v467
        %v469 = vpop.f32.mrf.mxu0
        %470 = vdwg.mxu0
        %v471 = vxor.u32 %v453, 2147483648
        %v472 = vxor.u32 %v458, 2147483648
        %v473 = vxor.u32 %v463, 2147483648
        %v474 = vxor.u32 %v468, 2147483648
        %v475 = vmul.f32 %v471, 1.442695
        %v476 = vpow.pop %v475
        %v477 = vmul.f32 %v472, 1.442695
        %v478 = vpow.pop %v477
        %v479 = vmul.f32 %v473, 1.442695
        %v480 = vpow.pop %v479
        %v481 = vmul.f32 %v474, 1.442695
        %v482 = vpow.pop %v481
        %v483 = vadd.f32 %v476, 1.0
        %v484 = vadd.f32 %v478, 1.0
        %v485 = vadd.f32 %v480, 1.0
        %v486 = vadd.f32 %v482, 1.0
        %v487 = vrcp.pop %v483
        %v488 = vmul.f32 1.0, %v487
        %v489 = vrcp.pop %v484
        %v490 = vmul.f32 1.0, %v489
        %v491 = vrcp.pop %v485
        %v492 = vmul.f32 1.0, %v491
        %v493 = vrcp.pop %v486
        %v494 = vmul.f32 1.0, %v493
        %v496 = vsel %vm278, %v260, 0
        %498 = vmatprep.subr.mxu0 0.0
        %499 = vmatpush1.msra.mxu0 0.0
        %500 = vmatprep.subr.mxu0 0.0
        %501 = vmatpush1.msra.mxu0 0.0
        %502 = vmatprep.subr.mxu0 0.0
        %503 = vmatpush1.msra.mxu0 0.0
        %504 = vmatprep.subr.mxu0 0.0
        %505 = vmatpush1.msra.mxu0 0.0
        %506 = vmatprep.subr.mxu0 0.0
        %507 = vmatpush1.msra.mxu0 0.0
        %508 = vmatprep.subr.mxu0 0.0
        %509 = vmatpush1.msra.mxu0 0.0
        %510 = vmatprep.subr.mxu0 0.0
        %511 = vmatpush1.msra.mxu0 0.0
        %512 = vmatprep.subr.mxu0 0.0
        %513 = vmatpush1.msra.mxu0 0.0
        %514 = vmatprep.subr.mxu0 0.0
        %515 = vmatpush1.msra.mxu0 0.0
        %516 = vmatprep.subr.mxu0 0.0
        %517 = vmatpush1.msra.mxu0 0.0
        %518 = vmatprep.subr.mxu0 0.0
        %519 = vmatpush1.msra.mxu0 0.0
        %520 = vmatprep.subr.mxu0 0.0
        %521 = vmatpush1.msra.mxu0 0.0
        %522 = vmatprep.subr.mxu0 %v250
        %523 = vmatpush1.msra.mxu0 %v249
        %524 = vmatprep.subr.mxu0 %v248
        %525 = vmatpush1.msra.mxu0 %v247
        %526 = vmatprep.subr.mxu0 %v246
        %527 = vmatpush1.msra.mxu0 %v245
        %528 = vmatprep.subr.mxu0 %v244
        %529 = vmatpush1.msra.mxu0 %v243
        %530 = vmatprep.subr.mxu0 0.0
        %531 = vmatpush2.msra.mxu0 0.0
        %532 = vmatprep.subr.mxu0 0.0
        %533 = vmatpush2.msra.mxu0 0.0
        %534 = vmatprep.subr.mxu0 0.0
        %535 = vmatpush2.msra.mxu0 0.0
        %536 = vmatprep.subr.mxu0 0.0
        %537 = vmatpush2.msra.mxu0 0.0
        %538 = vmatprep.subr.mxu0 0.0
        %539 = vmatpush2.msra.mxu0 0.0
        %540 = vmatprep.subr.mxu0 0.0
        %541 = vmatpush2.msra.mxu0 0.0
        %542 = vmatprep.subr.mxu0 0.0
        %543 = vmatpush2.msra.mxu0 0.0
        %544 = vmatprep.subr.mxu0 0.0
        %545 = vmatpush2.msra.mxu0 0.0
        %546 = vmatprep.subr.mxu0 0.0
        %547 = vmatpush2.msra.mxu0 0.0
        %548 = vmatprep.subr.mxu0 0.0
        %549 = vmatpush2.msra.mxu0 0.0
        %550 = vmatprep.subr.mxu0 0.0
        %551 = vmatpush2.msra.mxu0 0.0
        %552 = vmatprep.subr.mxu0 0.0
        %553 = vmatpush2.msra.mxu0 0.0
        %554 = vmatprep.subr.mxu0 0.0
        %555 = vmatpush2.msra.mxu0 0.0
        %556 = vmatprep.subr.mxu0 0.0
        %557 = vmatpush2.msra.mxu0 0.0
        %558 = vmatprep.subr.mxu0 0.0
        %559 = vmatpush2.msra.mxu0 0.0
        %560 = vmatprep.subr.mxu0 0.0
        %561 = vmatpush2.msra.mxu0 0.0
        %562 = vmatprep.mubr.f32.mxu0 0.0
        %563 = vmatmul.mubr.f32.gmra.mxu0 %v496
        %v564 = vpop.f32.mrf.mxu0
        %v565 = vadd.f32 0.0, %v564
        %v566 = vpop.f32.mrf.mxu0
        %v567 = vadd.f32 0.0, %v566
        %568 = vdwg.mxu0
        %v569 = vxor.u32 %v565, 2147483648
        %v570 = vxor.u32 %v567, 2147483648
        %v571 = vmul.f32 %v569, 1.442695
        %v572 = vpow.pop %v571
        %v573 = vmul.f32 %v570, 1.442695
        %v574 = vpow.pop %v573
        %v575 = vadd.f32 %v572, 1.0
        %v576 = vadd.f32 %v574, 1.0
        %v577 = vrcp.pop %v575
        %v578 = vmul.f32 1.0, %v577
        %v579 = vrcp.pop %v576
        %v580 = vmul.f32 1.0, %v579
        %582 = vset.pattern.permute.xlu0 0
        %583 = vperm.xlu0 %582, %v488
        %v584 = vpop.permute.xlu0 %583
        %587 = vset.pattern.permute.xlu0 0
        %588 = vperm.xlu0 %587, %v490
        %v589 = vpop.permute.xlu0 %588
        %592 = vset.pattern.permute.xlu0 0
        %593 = vperm.xlu0 %592, %v492
        %v594 = vpop.permute.xlu0 %593
        %597 = vset.pattern.permute.xlu0 0
        %598 = vperm.xlu0 %597, %v494
        %v599 = vpop.permute.xlu0 %598
        %v601 = vlaneseq
        %v602 = vshrl.u32 %v601, 7
        %v603 = vsub.s32 0, %v602
        %v604 = vrot.slane %v578, %v603
        %v605 = vlaneseq
        %v606 = vshrl.u32 %v605, 7
        %v607 = vsub.s32 0, %v606
        %v608 = vrot.slane %v580, %v607
        %v609 = vadd.f32 %v584, %v604
        %v610 = vadd.f32 %v584, %v608
        %v611 = vadd.f32 %v589, %v604
        %v612 = vadd.f32 %v589, %v608
        %v613 = vadd.f32 %v594, %v604
        %v614 = vadd.f32 %v594, %v608
        %v615 = vadd.f32 %v599, %v604
        %v616 = vadd.f32 %v599, %v608
        %v617 = vmul.f32 %v243, %v609
        %v618 = vmul.f32 %v244, %v610
        %v619 = vmul.f32 %v245, %v611
        %v620 = vmul.f32 %v246, %v612
        %v621 = vmul.f32 %v247, %v613
        %v622 = vmul.f32 %v248, %v614
        %v623 = vmul.f32 %v249, %v615
        %v624 = vmul.f32 %v250, %v616
        %625 = vst [vmem:[%s242] sm:$0xff] %v617
        %626 = vst [vmem:[%s242 + $0x8] sm:$0xff] %v618
        %627 = vst [vmem:[%s242 + $0x10] sm:$0xff] %v619
        %628 = vst [vmem:[%s242 + $0x18] sm:$0xff] %v620
        %629 = vst [vmem:[%s242 + $0x20] sm:$0xff] %v621
        %630 = vst [vmem:[%s242 + $0x28] sm:$0xff] %v622
        %631 = vst [vmem:[%s242 + $0x30] sm:$0xff] %v623
        %632 = vst [vmem:[%s242 + $0x38] sm:$0xff] %v624
        %s633 = sand.u32 %s140, 1
        %s634 = scalar_lea.sflag [#allocation4], %s633
        %s635 = sand.u32 %s140, 1
        %s636 = smul.addr %s635, 64
        %s637 = scalar_lea.vmem [#allocation5], %s636
        // Predicated region
        $region45: #{tpu_custom_call.1} parent=39 // pred_check
          %p638 = pneg %p150
        $region46: #{tpu_custom_call.1} parent=39 // pred_check_branch
          %640 = sbr.rel (%p638) target = $region48
        $region47: #{tpu_custom_call.1} parent=39 // pred_region
          %s642 = ssub.s32 1024, 1024
          %643 = vsyncadd %s634, %s642
          %s644 = smul.addr %s22, 8
          %s645 = smul.addr %s644, 128
          %s646 = scalar_lea.hbm %s5, %s645
          %s647 = sshll.u32 %s637, 4
          %s648 = int_to_ptr.vmem [resolvable:$true] %s647
          %653 = dma.vmem_to_hbm [thread:$0]  %s648, 1024, %s646, %s634, 256, 256, 16
        $region48: #{tpu_custom_call.1} parent=39 // pred_fallthru
          _
      $region40: #{tpu_custom_call.1} parent=5 // pred_fallthru
        _
      %p654 = scmp.le.s32.totalorder 2, %s17
      // Predicated region
      $region49: #{tpu_custom_call.1} parent=5 // pred_check
        %p655 = pneg %p654
      $region50: #{tpu_custom_call.1} parent=5 // pred_check_branch
        %657 = sbr.rel (%p655) target = $region52
      $region51: #{tpu_custom_call.1} parent=5 // pred_region
        %s658 = ssub.s32 %s17, 2
        // Predicated region
        $region53: #{tpu_custom_call.1} parent=51 // pred_check
          %p659 = pneg %p156
        $region54: #{tpu_custom_call.1} parent=51 // pred_check_branch
          %661 = sbr.rel (%p659) target = $region56
        $region55: #{tpu_custom_call.1} parent=51 // pred_region
          %s662 = sand.u32 %s141, 1
          %s663 = scalar_lea.sflag [#allocation4], %s662
          %s664 = sand.u32 %s141, 1
          %s665 = smul.addr %s664, 64
          %s666 = scalar_lea.vmem [#allocation5], %s665
          %667 = dma.done %s663, 1024
        $region56: #{tpu_custom_call.1} parent=51 // pred_fallthru
          _
      $region52: #{tpu_custom_call.1} parent=5 // pred_fallthru
        _
    $region6: #{tpu_custom_call.1} parent=1 // loop_footer
      %s21 = sadd.s32 1, %s17
    $region7: #{tpu_custom_call.1} parent=1 // loop_footer_branch
      %16 = sbr.rel target = $region3
    $region8: #{tpu_custom_call.1} parent=1 // loop_exit
      _
    %668 = vsyncpa [#allocation3], 1
    %s669 = scalar_lea.sflag [#allocation3], 1
    %670 = vsyncpa %s669, 1
    %671 = vsyncpa [#allocation4], 1
    %s672 = scalar_lea.sflag [#allocation4], 1
    %673 = vsyncpa %s672, 1

</llo_original>
